<compile_context>
chip_gen: v6e
topology: v6e:2x2x1
jax: 0.10.0
libtpu: 0.0.40
codegen_flags: <defaults>
</compile_context>

<pallas_src>
import math
import functools

import jax
import jax.numpy as jnp
from jax.experimental import pallas as pl
from jax.experimental.pallas import tpu as pltpu


# ---------------------------------------------------------------------------
# Kernels: K-tiled matmul with f32 accumulator, optional fused bias.
# ---------------------------------------------------------------------------
def _mm_bias_kernel(a_ref, b_ref, bias_ref, o_ref, acc_ref):
    k = pl.program_id(2)

    @pl.when(k == 0)
    def _():
        acc_ref[...] = jnp.zeros_like(acc_ref)

    acc_ref[...] += jnp.dot(
        a_ref[...], b_ref[...], preferred_element_type=jnp.float32
    )

    @pl.when(k == pl.num_programs(2) - 1)
    def _():
        o_ref[...] = (acc_ref[...] + bias_ref[...]).astype(o_ref.dtype)


def _mm_kernel(a_ref, b_ref, o_ref, acc_ref):
    k = pl.program_id(2)

    @pl.when(k == 0)
    def _():
        acc_ref[...] = jnp.zeros_like(acc_ref)

    acc_ref[...] += jnp.dot(
        a_ref[...], b_ref[...], preferred_element_type=jnp.float32
    )

    @pl.when(k == pl.num_programs(2) - 1)
    def _():
        o_ref[...] = acc_ref[...].astype(o_ref.dtype)


# ---------------------------------------------------------------------------
# Tiling helpers
# ---------------------------------------------------------------------------
def _round_up(x, m):
    return ((x + m - 1) // m) * m


def _pad2(x, rows, cols):
    r, c = x.shape
    if r == rows and c == cols:
        return x
    return jnp.pad(x, ((0, rows - r), (0, cols - c)))


def _pick_tiles(m, k, n):
    # Row tile 256 feeds the 2x256x256 MXUs on v6e/v7x; small matrices get a
    # single 16-aligned full tile.  K tile capped at 512 keeps per-step VMEM
    # (~2*(tm*tk + tk*tn)*2B + acc) around a megabyte regardless of graph
    # size; N tile is padded to lane width (128) for dense vst stores.
    tm = 256 if m >= 256 else _round_up(max(m, 1), 16)
    tk = min(512, _round_up(max(k, 1), 128))
    tn = min(512, _round_up(max(n, 1), 128))
    return tm, tk, tn


# ---------------------------------------------------------------------------
# Generic tiled matmul:  (M,K) @ (K,N) [+ bias(1,N)]  ->  (M,N) float32
# ---------------------------------------------------------------------------
def _tiled_matmul(a, b, bias=None, *, compute_dtype=jnp.bfloat16,
                  out_dtype=jnp.float32):
    m, k = a.shape
    k2, n = b.shape
    assert k == k2, (a.shape, b.shape)

    tm, tk, tn = _pick_tiles(m, k, n)
    mp = _round_up(m, tm)
    kp = _round_up(k, tk)
    np_ = _round_up(n, tn)

    a_p = _pad2(a, mp, kp).astype(compute_dtype)
    b_p = _pad2(b, kp, np_).astype(compute_dtype)

    grid = (mp // tm, np_ // tn, kp // tk)
    a_spec = pl.BlockSpec((tm, tk), lambda i, j, kk: (i, kk))
    b_spec = pl.BlockSpec((tk, tn), lambda i, j, kk: (kk, j))
    o_spec = pl.BlockSpec((tm, tn), lambda i, j, kk: (i, j))

    compiler_params = pltpu.CompilerParams(
        dimension_semantics=("parallel", "parallel", "arbitrary"),
        # Explicit limit: well above the 16 MiB v5e default, with headroom
        # under v7x's 64 MiB physical VMEM.  Actual per-step use is ~1 MB.
        vmem_limit_bytes=48 * 1024 * 1024,
    )
    scratch = [pltpu.VMEM((tm, tn), jnp.float32)]
    out_shape = jax.ShapeDtypeStruct((mp, np_), out_dtype)

    if bias is not None:
        bias_p = _pad2(bias.reshape(1, -1).astype(jnp.float32), 1, np_)
        out_p = pl.pallas_call(
            _mm_bias_kernel,
            out_shape=out_shape,
            grid_spec=pltpu.PrefetchScalarGridSpec(
                num_scalar_prefetch=0,
                grid=grid,
                in_specs=[a_spec, b_spec,
                          pl.BlockSpec((1, tn), lambda i, j, kk: (0, j))],
                out_specs=o_spec,
                scratch_shapes=scratch,
            ),
            compiler_params=compiler_params,
        )(a_p, b_p, bias_p)
    else:
        out_p = pl.pallas_call(
            _mm_kernel,
            out_shape=out_shape,
            grid_spec=pltpu.PrefetchScalarGridSpec(
                num_scalar_prefetch=0,
                grid=grid,
                in_specs=[a_spec, b_spec],
                out_specs=o_spec,
                scratch_shapes=scratch,
            ),
            compiler_params=compiler_params,
        )(a_p, b_p)

    if mp != m or np_ != n:
        out_p = out_p[:m, :n]
    return out_p


# ---------------------------------------------------------------------------
# GraphConvolution forward
# ---------------------------------------------------------------------------
@functools.partial(jax.jit, static_argnames=("has_bias", "compute_dtype"))
def graph_convolution(inp, adj, weight, bias=None, *, has_bias=True,
                      compute_dtype=jnp.bfloat16):
    """Pallas implementation of GraphConvolution.forward.

    inp:    (N, F_in) float32
    adj:    (N, N)    float32 dense adjacency (spmm with dense adj == matmul)
    weight: (F_in, F_out) float32
    bias:   (F_out,) or (1, F_out) float32, optional
    """
    # support = input @ weight
    support = _tiled_matmul(inp, weight, None, compute_dtype=compute_dtype)
    # output = adj @ support (+ bias), bias fused into the writeback.
    out = _tiled_matmul(adj, support, bias if has_bias else None,
                        compute_dtype=compute_dtype)
    return out


def init_params(key, in_features, out_features, bias=True):
    """Parameter init mirroring GraphConvolution.reset_parameters
    (bias kept in the PyTorch (F_out,) layout; wrapper normalizes it)."""
    stdv = 1.0 / math.sqrt(out_features)
    kw, kb = jax.random.split(key)
    weight = jax.random.uniform(
        kw, (in_features, out_features), jnp.float32, minval=-stdv, maxval=stdv
    )
    b = (
        jax.random.uniform(
            kb, (out_features,), jnp.float32, minval=-stdv, maxval=stdv
        )
        if bias
        else None
    )
    return weight, b


# ---------------------------------------------------------------------------
# Main
# ---------------------------------------------------------------------------
if __name__ == "__main__":
    key = jax.random.PRNGKey(0)
    k_x, k_a, k_p = jax.random.split(key, 3)

    N = 128          # number of graph nodes
    in_features = 64
    out_features = 32

    x = jax.random.normal(k_x, (N, in_features), jnp.float32)

    # Dense, row-normalized adjacency with self-loops (torch.spmm semantics
    # with a dense adjacency == dense matmul).
    a_raw = (jax.random.uniform(k_a, (N, N)) < 0.1).astype(jnp.float32)
    a_raw = a_raw + jnp.eye(N, dtype=jnp.float32)
    deg = jnp.sum(a_raw, axis=1, keepdims=True)
    adj = a_raw / deg

    weight, bias = init_params(k_p, in_features, out_features, bias=True)

    out = graph_convolution(x, adj, weight, bias, has_bias=True)
    out = jax.block_until_ready(out)

    # Reference in plain JAX (f32); kernel uses bf16 MXU inputs with f32
    # accumulation, so allow a modest tolerance.
    ref = adj @ (x @ weight) + bias.reshape(1, -1)
    assert out.shape == (N, out_features)
    assert jnp.allclose(out, ref, atol=2e-2, rtol=2e-2), float(
        jnp.max(jnp.abs(out - ref))
    )

    print("KERNEL_OK")
</pallas_src>

<mosaic_0001>
module attributes {stable_mosaic.version = 11 : i64} {
  func.func @_mm_kernel(%arg0: i32, %arg1: i32, %arg2: i32, %arg3: memref<128x128xbf16, #tpu.memory_space<vmem>>, %arg4: memref<128x128xbf16, #tpu.memory_space<vmem>>, %arg5: memref<128x128xf32, #tpu.memory_space<vmem>>, %arg6: memref<128x128xf32, #tpu.memory_space<vmem>>) attributes {dimension_semantics = [#tpu.dimension_semantics<parallel>, #tpu.dimension_semantics<parallel>, #tpu.dimension_semantics<arbitrary>], iteration_bounds = array<i64: 1, 1, 1>, scalar_prefetch = 0 : i64, scratch_operands = 1 : i64, tpu.core_type = #tpu.core_type<tc>, window_params = [{transform_indices = @transform_0, window_bounds = array<i64: 128, 128>}, {transform_indices = @transform_1, window_bounds = array<i64: 128, 128>}, {transform_indices = @transform_2, window_bounds = array<i64: 128, 128>}]} {
    %c0_i32 = arith.constant 0 : i32
    %0 = arith.cmpi eq, %arg2, %c0_i32 : i32
    %1 = arith.extui %0 : i1 to i32
    %c0_i32_0 = arith.constant 0 : i32
    %2 = arith.cmpi ne, %1, %c0_i32_0 : i32
    scf.if %2 {
      %cst_10 = arith.constant 0.000000e+00 : f32
      %12 = vector.broadcast %cst_10 : f32 to vector<128x128xf32>
      %c0_11 = arith.constant 0 : index
      %c0_12 = arith.constant 0 : index
      %13 = vector.load %arg6[%c0_11, %c0_12] : memref<128x128xf32, #tpu.memory_space<vmem>>, vector<128x128xf32>
      tpu.vector_store %arg6[%c0_11, %c0_12], %12 {strides = array<i32>} : memref<128x128xf32, #tpu.memory_space<vmem>>, vector<128x128xf32>,
    } else {
    }
    %c0 = arith.constant 0 : index
    %c0_1 = arith.constant 0 : index
    %3 = vector.load %arg6[%c0, %c0_1] : memref<128x128xf32, #tpu.memory_space<vmem>>, vector<128x128xf32>
    %c0_2 = arith.constant 0 : index
    %c0_3 = arith.constant 0 : index
    %4 = vector.load %arg3[%c0_2, %c0_3] : memref<128x128xbf16, #tpu.memory_space<vmem>>, vector<128x128xbf16>
    %c0_4 = arith.constant 0 : index
    %c0_5 = arith.constant 0 : index
    %5 = vector.load %arg4[%c0_4, %c0_5] : memref<128x128xbf16, #tpu.memory_space<vmem>>, vector<128x128xbf16>
    %cst = arith.constant dense<0.000000e+00> : vector<128x128xf32>
    %6 = tpu.matmul %4, %5, %cst {dimension_numbers = #tpu.dot_dimension_numbers<[1], [0], [0], [1], [0, 0, 1, 1], [], []>} : vector<128x128xbf16>, vector<128x128xbf16>, vector<128x128xf32> -> vector<128x128xf32>
    %7 = arith.addf %3, %6 : vector<128x128xf32>
    %c0_6 = arith.constant 0 : index
    %c0_7 = arith.constant 0 : index
    %8 = vector.load %arg6[%c0_6, %c0_7] : memref<128x128xf32, #tpu.memory_space<vmem>>, vector<128x128xf32>
    tpu.vector_store %arg6[%c0_6, %c0_7], %7 {strides = array<i32>} : memref<128x128xf32, #tpu.memory_space<vmem>>, vector<128x128xf32>,
    %c0_i32_8 = arith.constant 0 : i32
    %9 = arith.cmpi eq, %arg2, %c0_i32_8 : i32
    %10 = arith.extui %9 : i1 to i32
    %c0_i32_9 = arith.constant 0 : i32
    %11 = arith.cmpi ne, %10, %c0_i32_9 : i32
    scf.if %11 {
      %c0_10 = arith.constant 0 : index
      %c0_11 = arith.constant 0 : index
      %12 = vector.load %arg6[%c0_10, %c0_11] : memref<128x128xf32, #tpu.memory_space<vmem>>, vector<128x128xf32>
      %c0_12 = arith.constant 0 : index
      %c0_13 = arith.constant 0 : index
      %13 = vector.load %arg5[%c0_12, %c0_13] : memref<128x128xf32, #tpu.memory_space<vmem>>, vector<128x128xf32>
      tpu.vector_store %arg5[%c0_12, %c0_13], %12 {strides = array<i32>} : memref<128x128xf32, #tpu.memory_space<vmem>>, vector<128x128xf32>,
    } else {
    }
    return
  }
  func.func @transform_0(%arg0: i32, %arg1: i32, %arg2: i32) -> (i32, i32) {
    %c0_i32 = arith.constant 0 : i32
    return %arg0, %arg2 : i32, i32
  }
  func.func @transform_1(%arg0: i32, %arg1: i32, %arg2: i32) -> (i32, i32) {
    %c0_i32 = arith.constant 0 : i32
    return %arg2, %arg1 : i32, i32
  }
  func.func @transform_2(%arg0: i32, %arg1: i32, %arg2: i32) -> (i32, i32) {
    %c0_i32 = arith.constant 0 : i32
    return %arg0, %arg1 : i32, i32
  }
}

module attributes {stable_mosaic.version = 11 : i64} {
  func.func @_mm_bias_kernel(%arg0: i32, %arg1: i32, %arg2: i32, %arg3: memref<128x128xbf16, #tpu.memory_space<vmem>>, %arg4: memref<128x128xbf16, #tpu.memory_space<vmem>>, %arg5: memref<1x128xf32, #tpu.memory_space<vmem>>, %arg6: memref<128x128xf32, #tpu.memory_space<vmem>>, %arg7: memref<128x128xf32, #tpu.memory_space<vmem>>) attributes {dimension_semantics = [#tpu.dimension_semantics<parallel>, #tpu.dimension_semantics<parallel>, #tpu.dimension_semantics<arbitrary>], iteration_bounds = array<i64: 1, 1, 1>, scalar_prefetch = 0 : i64, scratch_operands = 1 : i64, tpu.core_type = #tpu.core_type<tc>, window_params = [{transform_indices = @transform_0, window_bounds = array<i64: 128, 128>}, {transform_indices = @transform_1, window_bounds = array<i64: 128, 128>}, {transform_indices = @transform_2, window_bounds = array<i64: 1, 128>}, {transform_indices = @transform_3, window_bounds = array<i64: 128, 128>}]} {
    %c0_i32 = arith.constant 0 : i32
    %0 = arith.cmpi eq, %arg2, %c0_i32 : i32
    %1 = arith.extui %0 : i1 to i32
    %c0_i32_0 = arith.constant 0 : i32
    %2 = arith.cmpi ne, %1, %c0_i32_0 : i32
    scf.if %2 {
      %cst_10 = arith.constant 0.000000e+00 : f32
      %12 = vector.broadcast %cst_10 : f32 to vector<128x128xf32>
      %c0_11 = arith.constant 0 : index
      %c0_12 = arith.constant 0 : index
      %13 = vector.load %arg7[%c0_11, %c0_12] : memref<128x128xf32, #tpu.memory_space<vmem>>, vector<128x128xf32>
      tpu.vector_store %arg7[%c0_11, %c0_12], %12 {strides = array<i32>} : memref<128x128xf32, #tpu.memory_space<vmem>>, vector<128x128xf32>,
    } else {
    }
    %c0 = arith.constant 0 : index
    %c0_1 = arith.constant 0 : index
    %3 = vector.load %arg7[%c0, %c0_1] : memref<128x128xf32, #tpu.memory_space<vmem>>, vector<128x128xf32>
    %c0_2 = arith.constant 0 : index
    %c0_3 = arith.constant 0 : index
    %4 = vector.load %arg3[%c0_2, %c0_3] : memref<128x128xbf16, #tpu.memory_space<vmem>>, vector<128x128xbf16>
    %c0_4 = arith.constant 0 : index
    %c0_5 = arith.constant 0 : index
    %5 = vector.load %arg4[%c0_4, %c0_5] : memref<128x128xbf16, #tpu.memory_space<vmem>>, vector<128x128xbf16>
    %cst = arith.constant dense<0.000000e+00> : vector<128x128xf32>
    %6 = tpu.matmul %4, %5, %cst {dimension_numbers = #tpu.dot_dimension_numbers<[1], [0], [0], [1], [0, 0, 1, 1], [], []>} : vector<128x128xbf16>, vector<128x128xbf16>, vector<128x128xf32> -> vector<128x128xf32>
    %7 = arith.addf %3, %6 : vector<128x128xf32>
    %c0_6 = arith.constant 0 : index
    %c0_7 = arith.constant 0 : index
    %8 = vector.load %arg7[%c0_6, %c0_7] : memref<128x128xf32, #tpu.memory_space<vmem>>, vector<128x128xf32>
    tpu.vector_store %arg7[%c0_6, %c0_7], %7 {strides = array<i32>} : memref<128x128xf32, #tpu.memory_space<vmem>>, vector<128x128xf32>,
    %c0_i32_8 = arith.constant 0 : i32
    %9 = arith.cmpi eq, %arg2, %c0_i32_8 : i32
    %10 = arith.extui %9 : i1 to i32
    %c0_i32_9 = arith.constant 0 : i32
    %11 = arith.cmpi ne, %10, %c0_i32_9 : i32
    scf.if %11 {
      %c0_10 = arith.constant 0 : index
      %c0_11 = arith.constant 0 : index
      %12 = vector.load %arg7[%c0_10, %c0_11] : memref<128x128xf32, #tpu.memory_space<vmem>>, vector<128x128xf32>
      %c0_12 = arith.constant 0 : index
      %c0_13 = arith.constant 0 : index
      %13 = vector.load %arg5[%c0_12, %c0_13] : memref<1x128xf32, #tpu.memory_space<vmem>>, vector<1x128xf32>
      %14 = vector.broadcast %13 : vector<1x128xf32> to vector<128x128xf32>
      %15 = arith.addf %12, %14 : vector<128x128xf32>
      %c0_14 = arith.constant 0 : index
      %c0_15 = arith.constant 0 : index
      %16 = vector.load %arg6[%c0_14, %c0_15] : memref<128x128xf32, #tpu.memory_space<vmem>>, vector<128x128xf32>
      tpu.vector_store %arg6[%c0_14, %c0_15], %15 {strides = array<i32>} : memref<128x128xf32, #tpu.memory_space<vmem>>, vector<128x128xf32>,
    } else {
    }
    return
  }
  func.func @transform_0(%arg0: i32, %arg1: i32, %arg2: i32) -> (i32, i32) {
    %c0_i32 = arith.constant 0 : i32
    return %arg0, %arg2 : i32, i32
  }
  func.func @transform_1(%arg0: i32, %arg1: i32, %arg2: i32) -> (i32, i32) {
    %c0_i32 = arith.constant 0 : i32
    return %arg2, %arg1 : i32, i32
  }
  func.func @transform_2(%arg0: i32, %arg1: i32, %arg2: i32) -> (i32, i32) {
    %c0_i32 = arith.constant 0 : i32
    %c0_i32_0 = arith.constant 0 : i32
    return %c0_i32, %arg1 : i32, i32
  }
  func.func @transform_3(%arg0: i32, %arg1: i32, %arg2: i32) -> (i32, i32) {
    %c0_i32 = arith.constant 0 : i32
    return %arg0, %arg1 : i32, i32
  }
}

</mosaic_0001>

<llo_original>
// kernel: graph_convolution.3
$region0: #{graph_convolution.3}
  #allocation0 [shape = 'u32[]', space=smem, size = 0x4, offset = 0x4, fixed_abs, tag = 'smem constant byte address 0x4 - core index']
  #allocation1 [shape = 'u32[144,128]{1,0:T(1,128)}', space=vmem, size = 0x12000, scoped, tag = 'internal scratch']
  #allocation2 [shape = 'f32[128,128]{1,0:T(8,128)}', space=vmem, size = 0x10000, scoped, tag = 'scratch operand']
  %s0 = inlined_call_operand.vmem [shape: bf16[128,128], index: 0, kind: input, shape index: {}]
  %s1 = inlined_call_operand.vmem [shape: bf16[128,128], index: 1, kind: input, shape index: {}]
  %s2 = inlined_call_operand.vmem [shape: f32[1,128], index: 2, kind: input, shape index: {}]
  %s3 = inlined_call_operand.vmem [shape: f32[128,128], index: 3, kind: output, shape index: {}]
  %s4 = sld [smem:[#allocation0]]
  $region30: #{graph_convolution.3} parent=0
    _
  %s6 = ssub.s32 1, %s4
  %s7 = scalar_select 0, %s6, %s4
  // Predicated region
  $region2: #{graph_convolution.3} parent=0 // pred_check
    _
  $region3: #{graph_convolution.3} parent=0 // pred_check_branch
    %9 = sbr.rel (0) target = $region5
  $region4: #{graph_convolution.3} parent=0 // pred_region
    _
  $region5: #{graph_convolution.3} parent=0 // pred_fallthru
    _
  // Predicated region
  $region6: #{graph_convolution.3} parent=0 // pred_check
    _
  $region7: #{graph_convolution.3} parent=0 // pred_check_branch
    %11 = sbr.rel (0) target = $region9
  $region8: #{graph_convolution.3} parent=0 // pred_region
    _
  $region9: #{graph_convolution.3} parent=0 // pred_fallthru
    _
  // Predicated region
  $region10: #{graph_convolution.3} parent=0 // pred_check
    _
  $region11: #{graph_convolution.3} parent=0 // pred_check_branch
    %13 = sbr.rel (0) target = $region13
  $region12: #{graph_convolution.3} parent=0 // pred_region
    _
  $region13: #{graph_convolution.3} parent=0 // pred_fallthru
    _
  %p15 = scmp.eq.s32.totalorder 0, 0
  // Predicated region
  $region14: #{graph_convolution.3} parent=0 // pred_check
    %p16 = pneg %p15
  $region15: #{graph_convolution.3} parent=0 // pred_check_branch
    %18 = sbr.rel (%p16) target = $region17
  $region16: #{graph_convolution.3} parent=0 // pred_region
    %19 = vst [vmem:[#allocation2] sm:$0xff] 0.0
    %20 = vst [vmem:[#allocation2 + $0x8] sm:$0xff] 0.0
    %21 = vst [vmem:[#allocation2 + $0x10] sm:$0xff] 0.0
    %22 = vst [vmem:[#allocation2 + $0x18] sm:$0xff] 0.0
    %23 = vst [vmem:[#allocation2 + $0x20] sm:$0xff] 0.0
    %24 = vst [vmem:[#allocation2 + $0x28] sm:$0xff] 0.0
    %25 = vst [vmem:[#allocation2 + $0x30] sm:$0xff] 0.0
    %26 = vst [vmem:[#allocation2 + $0x38] sm:$0xff] 0.0
    %27 = vst [vmem:[#allocation2 + $0x40] sm:$0xff] 0.0
    %28 = vst [vmem:[#allocation2 + $0x48] sm:$0xff] 0.0
    %29 = vst [vmem:[#allocation2 + $0x50] sm:$0xff] 0.0
    %30 = vst [vmem:[#allocation2 + $0x58] sm:$0xff] 0.0
    %31 = vst [vmem:[#allocation2 + $0x60] sm:$0xff] 0.0
    %32 = vst [vmem:[#allocation2 + $0x68] sm:$0xff] 0.0
    %33 = vst [vmem:[#allocation2 + $0x70] sm:$0xff] 0.0
    %34 = vst [vmem:[#allocation2 + $0x78] sm:$0xff] 0.0
  $region17: #{graph_convolution.3} parent=0 // pred_fallthru
    _
  %v35 = vld [vmem:[#allocation2] sm:$0xff]
  %v36 = vld [vmem:[#allocation2 + $0x8] sm:$0xff]
  %v37 = vld [vmem:[#allocation2 + $0x10] sm:$0xff]
  %v38 = vld [vmem:[#allocation2 + $0x18] sm:$0xff]
  %v39 = vld [vmem:[#allocation2 + $0x20] sm:$0xff]
  %v40 = vld [vmem:[#allocation2 + $0x28] sm:$0xff]
  %v41 = vld [vmem:[#allocation2 + $0x30] sm:$0xff]
  %v42 = vld [vmem:[#allocation2 + $0x38] sm:$0xff]
  %v43 = vld [vmem:[#allocation2 + $0x40] sm:$0xff]
  %v44 = vld [vmem:[#allocation2 + $0x48] sm:$0xff]
  %v45 = vld [vmem:[#allocation2 + $0x50] sm:$0xff]
  %v46 = vld [vmem:[#allocation2 + $0x58] sm:$0xff]
  %v47 = vld [vmem:[#allocation2 + $0x60] sm:$0xff]
  %v48 = vld [vmem:[#allocation2 + $0x68] sm:$0xff]
  %v49 = vld [vmem:[#allocation2 + $0x70] sm:$0xff]
  %v50 = vld [vmem:[#allocation2 + $0x78] sm:$0xff]
  %v51 = vld [vmem:[%s0] sm:$0xf]
  %v52 = vld [vmem:[%s0 + $0x4] sm:$0xf]
  %v53 = vld [vmem:[%s0 + $0x8] sm:$0xf]
  %v54 = vld [vmem:[%s0 + $0xc] sm:$0xf]
  %v55 = vld [vmem:[%s0 + $0x10] sm:$0xf]
  %v56 = vld [vmem:[%s0 + $0x14] sm:$0xf]
  %v57 = vld [vmem:[%s0 + $0x18] sm:$0xf]
  %v58 = vld [vmem:[%s0 + $0x1c] sm:$0xf]
  %v59 = vld [vmem:[%s0 + $0x20] sm:$0xf]
  %v60 = vld [vmem:[%s0 + $0x24] sm:$0xf]
  %v61 = vld [vmem:[%s0 + $0x28] sm:$0xf]
  %v62 = vld [vmem:[%s0 + $0x2c] sm:$0xf]
  %v63 = vld [vmem:[%s0 + $0x30] sm:$0xf]
  %v64 = vld [vmem:[%s0 + $0x34] sm:$0xf]
  %v65 = vld [vmem:[%s0 + $0x38] sm:$0xf]
  %v66 = vld [vmem:[%s0 + $0x3c] sm:$0xf]
  %v67 = vld [vmem:[%s1] sm:$0xf]
  %v68 = vld [vmem:[%s1 + $0x4] sm:$0xf]
  %v69 = vld [vmem:[%s1 + $0x8] sm:$0xf]
  %v70 = vld [vmem:[%s1 + $0xc] sm:$0xf]
  %v71 = vld [vmem:[%s1 + $0x10] sm:$0xf]
  %v72 = vld [vmem:[%s1 + $0x14] sm:$0xf]
  %v73 = vld [vmem:[%s1 + $0x18] sm:$0xf]
  %v74 = vld [vmem:[%s1 + $0x1c] sm:$0xf]
  %v75 = vld [vmem:[%s1 + $0x20] sm:$0xf]
  %v76 = vld [vmem:[%s1 + $0x24] sm:$0xf]
  %v77 = vld [vmem:[%s1 + $0x28] sm:$0xf]
  %v78 = vld [vmem:[%s1 + $0x2c] sm:$0xf]
  %v79 = vld [vmem:[%s1 + $0x30] sm:$0xf]
  %v80 = vld [vmem:[%s1 + $0x34] sm:$0xf]
  %v81 = vld [vmem:[%s1 + $0x38] sm:$0xf]
  %v82 = vld [vmem:[%s1 + $0x3c] sm:$0xf]
  %v99 = vunpack.c.l.b16 %v51
  %v100 = vunpack.c.l.b16 %v52
  %v101 = vunpack.c.l.b16 %v53
  %v102 = vunpack.c.l.b16 %v54
  %v103 = vunpack.c.l.b16 %v55
  %v104 = vunpack.c.l.b16 %v56
  %v105 = vunpack.c.l.b16 %v57
  %v106 = vunpack.c.l.b16 %v58
  %v107 = vunpack.c.l.b16 %v59
  %v108 = vunpack.c.l.b16 %v60
  %v109 = vunpack.c.l.b16 %v61
  %v110 = vunpack.c.l.b16 %v62
  %v111 = vunpack.c.l.b16 %v63
  %v112 = vunpack.c.l.b16 %v64
  %v113 = vunpack.c.l.b16 %v65
  %v114 = vunpack.c.l.b16 %v66
  %v115 = vpack.c.b16 %v100, %v99
  %v116 = vpack.c.b16 %v102, %v101
  %v117 = vpack.c.b16 %v104, %v103
  %v118 = vpack.c.b16 %v106, %v105
  %v119 = vpack.c.b16 %v108, %v107
  %v120 = vpack.c.b16 %v110, %v109
  %v121 = vpack.c.b16 %v112, %v111
  %v122 = vpack.c.b16 %v114, %v113
  %v147 = vunpack.c.l.b16 %v67
  %v148 = vunpack.c.l.b16 %v68
  %v149 = vunpack.c.l.b16 %v69
  %v150 = vunpack.c.l.b16 %v70
  %v151 = vunpack.c.l.b16 %v71
  %v152 = vunpack.c.l.b16 %v72
  %v153 = vunpack.c.l.b16 %v73
  %v154 = vunpack.c.l.b16 %v74
  %v155 = vunpack.c.l.b16 %v75
  %v156 = vunpack.c.l.b16 %v76
  %v157 = vunpack.c.l.b16 %v77
  %v158 = vunpack.c.l.b16 %v78
  %v159 = vunpack.c.l.b16 %v79
  %v160 = vunpack.c.l.b16 %v80
  %v161 = vunpack.c.l.b16 %v81
  %v162 = vunpack.c.l.b16 %v82
  %v163 = vpack.c.b16 %v148, %v147
  %v164 = vpack.c.b16 %v150, %v149
  %v165 = vpack.c.b16 %v152, %v151
  %v166 = vpack.c.b16 %v154, %v153
  %v167 = vpack.c.b16 %v156, %v155
  %v168 = vpack.c.b16 %v158, %v157
  %v169 = vpack.c.b16 %v160, %v159
  %v170 = vpack.c.b16 %v162, %v161
  %179 = vmatprep.subr.bf16.mxu0 0
  %180 = vmatpush1.bf16.msra.mxu0 %v170
  %181 = vmatprep.subr.bf16.mxu0 0
  %182 = vmatpush1.bf16.msra.mxu0 %v169
  %183 = vmatprep.subr.bf16.mxu0 0
  %184 = vmatpush1.bf16.msra.mxu0 %v168
  %185 = vmatprep.subr.bf16.mxu0 0
  %186 = vmatpush1.bf16.msra.mxu0 %v167
  %187 = vmatprep.subr.bf16.mxu0 0
  %188 = vmatpush1.bf16.msra.mxu0 %v166
  %189 = vmatprep.subr.bf16.mxu0 0
  %190 = vmatpush1.bf16.msra.mxu0 %v165
  %191 = vmatprep.subr.bf16.mxu0 0
  %192 = vmatpush1.bf16.msra.mxu0 %v164
  %193 = vmatprep.subr.bf16.mxu0 0
  %194 = vmatpush1.bf16.msra.mxu0 %v163
  %195 = vmatprep.subr.bf16.mxu0 0
  %196 = vmatpush2.bf16.msra.mxu0 0
  %197 = vmatprep.subr.bf16.mxu0 0
  %198 = vmatpush2.bf16.msra.mxu0 0
  %199 = vmatprep.subr.bf16.mxu0 0
  %200 = vmatpush2.bf16.msra.mxu0 0
  %201 = vmatprep.subr.bf16.mxu0 0
  %202 = vmatpush2.bf16.msra.mxu0 0
  %203 = vmatprep.subr.bf16.mxu0 0
  %204 = vmatpush2.bf16.msra.mxu0 0
  %205 = vmatprep.subr.bf16.mxu0 0
  %206 = vmatpush2.bf16.msra.mxu0 0
  %207 = vmatprep.subr.bf16.mxu0 0
  %208 = vmatpush2.bf16.msra.mxu0 0
  %209 = vmatprep.subr.bf16.mxu0 0
  %210 = vmatpush2.bf16.msra.mxu0 0
  %211 = vmatprep.mubr.bf16.mxu0 0
  %212 = vmatmul.mubr.bf16.gmra.mxu0 %v115
  %v213 = vpop.f32.mrf.mxu0
  %v214 = vadd.f32 0.0, %v213
  %v215 = vpop.f32.mrf.mxu0
  %v216 = vpop.f32.mrf.mxu0
  %v217 = vadd.f32 0.0, %v216
  %v218 = vpop.f32.mrf.mxu0
  %219 = vmatprep.mubr.bf16.mxu0 0
  %220 = vmatmul.mubr.bf16.gmra.mxu0 %v116
  %v221 = vpop.f32.mrf.mxu0
  %v222 = vadd.f32 0.0, %v221
  %v223 = vpop.f32.mrf.mxu0
  %v224 = vpop.f32.mrf.mxu0
  %v225 = vadd.f32 0.0, %v224
  %v226 = vpop.f32.mrf.mxu0
  %227 = vmatprep.mubr.bf16.mxu0 0
  %228 = vmatmul.mubr.bf16.gmra.mxu0 %v117
  %v229 = vpop.f32.mrf.mxu0
  %v230 = vadd.f32 0.0, %v229
  %v231 = vpop.f32.mrf.mxu0
  %v232 = vpop.f32.mrf.mxu0
  %v233 = vadd.f32 0.0, %v232
  %v234 = vpop.f32.mrf.mxu0
  %235 = vmatprep.mubr.bf16.mxu0 0
  %236 = vmatmul.mubr.bf16.gmra.mxu0 %v118
  %v237 = vpop.f32.mrf.mxu0
  %v238 = vadd.f32 0.0, %v237
  %v239 = vpop.f32.mrf.mxu0
  %v240 = vpop.f32.mrf.mxu0
  %v241 = vadd.f32 0.0, %v240
  %v242 = vpop.f32.mrf.mxu0
  %243 = vmatprep.mubr.bf16.mxu0 0
  %244 = vmatmul.mubr.bf16.gmra.mxu0 %v119
  %v245 = vpop.f32.mrf.mxu0
  %v246 = vadd.f32 0.0, %v245
  %v247 = vpop.f32.mrf.mxu0
  %v248 = vpop.f32.mrf.mxu0
  %v249 = vadd.f32 0.0, %v248
  %v250 = vpop.f32.mrf.mxu0
  %251 = vmatprep.mubr.bf16.mxu0 0
  %252 = vmatmul.mubr.bf16.gmra.mxu0 %v120
  %v253 = vpop.f32.mrf.mxu0
  %v254 = vadd.f32 0.0, %v253
  %v255 = vpop.f32.mrf.mxu0
  %v256 = vpop.f32.mrf.mxu0
  %v257 = vadd.f32 0.0, %v256
  %v258 = vpop.f32.mrf.mxu0
  %259 = vmatprep.mubr.bf16.mxu0 0
  %260 = vmatmul.mubr.bf16.gmra.mxu0 %v121
  %v261 = vpop.f32.mrf.mxu0
  %v262 = vadd.f32 0.0, %v261
  %v263 = vpop.f32.mrf.mxu0
  %v264 = vpop.f32.mrf.mxu0
  %v265 = vadd.f32 0.0, %v264
  %v266 = vpop.f32.mrf.mxu0
  %267 = vmatprep.mubr.bf16.mxu0 0
  %268 = vmatmul.mubr.bf16.gmra.mxu0 %v122
  %v269 = vpop.f32.mrf.mxu0
  %v270 = vadd.f32 0.0, %v269
  %v271 = vpop.f32.mrf.mxu0
  %v272 = vpop.f32.mrf.mxu0
  %v273 = vadd.f32 0.0, %v272
  %v274 = vpop.f32.mrf.mxu0
  %275 = vdwg.mxu0
  %v276 = vadd.f32 %v35, %v214
  %v277 = vadd.f32 %v36, %v217
  %v278 = vadd.f32 %v37, %v222
  %v279 = vadd.f32 %v38, %v225
  %v280 = vadd.f32 %v39, %v230
  %v281 = vadd.f32 %v40, %v233
  %v282 = vadd.f32 %v41, %v238
  %v283 = vadd.f32 %v42, %v241
  %v284 = vadd.f32 %v43, %v246
  %v285 = vadd.f32 %v44, %v249
  %v286 = vadd.f32 %v45, %v254
  %v287 = vadd.f32 %v46, %v257
  %v288 = vadd.f32 %v47, %v262
  %v289 = vadd.f32 %v48, %v265
  %v290 = vadd.f32 %v49, %v270
  %v291 = vadd.f32 %v50, %v273
  %292 = vst [vmem:[#allocation2] sm:$0xff] %v276
  %293 = vst [vmem:[#allocation2 + $0x8] sm:$0xff] %v277
  %294 = vst [vmem:[#allocation2 + $0x10] sm:$0xff] %v278
  %295 = vst [vmem:[#allocation2 + $0x18] sm:$0xff] %v279
  %296 = vst [vmem:[#allocation2 + $0x20] sm:$0xff] %v280
  %297 = vst [vmem:[#allocation2 + $0x28] sm:$0xff] %v281
  %298 = vst [vmem:[#allocation2 + $0x30] sm:$0xff] %v282
  %299 = vst [vmem:[#allocation2 + $0x38] sm:$0xff] %v283
  %300 = vst [vmem:[#allocation2 + $0x40] sm:$0xff] %v284
  %301 = vst [vmem:[#allocation2 + $0x48] sm:$0xff] %v285
  %302 = vst [vmem:[#allocation2 + $0x50] sm:$0xff] %v286
  %303 = vst [vmem:[#allocation2 + $0x58] sm:$0xff] %v287
  %304 = vst [vmem:[#allocation2 + $0x60] sm:$0xff] %v288
  %305 = vst [vmem:[#allocation2 + $0x68] sm:$0xff] %v289
  %306 = vst [vmem:[#allocation2 + $0x70] sm:$0xff] %v290
  %307 = vst [vmem:[#allocation2 + $0x78] sm:$0xff] %v291
  // Predicated region
  $region18: #{graph_convolution.3} parent=0 // pred_check
    %p308 = pneg %p15
  $region19: #{graph_convolution.3} parent=0 // pred_check_branch
    %310 = sbr.rel (%p308) target = $region21
  $region20: #{graph_convolution.3} parent=0 // pred_region
    %v311 = vld [vmem:[#allocation2] sm:$0xff]
    %v312 = vld [vmem:[#allocation2 + $0x8] sm:$0xff]
    %v313 = vld [vmem:[#allocation2 + $0x10] sm:$0xff]
    %v314 = vld [vmem:[#allocation2 + $0x18] sm:$0xff]
    %v315 = vld [vmem:[#allocation2 + $0x20] sm:$0xff]
    %v316 = vld [vmem:[#allocation2 + $0x28] sm:$0xff]
    %v317 = vld [vmem:[#allocation2 + $0x30] sm:$0xff]
    %v318 = vld [vmem:[#allocation2 + $0x38] sm:$0xff]
    %v319 = vld [vmem:[#allocation2 + $0x40] sm:$0xff]
    %v320 = vld [vmem:[#allocation2 + $0x48] sm:$0xff]
    %v321 = vld [vmem:[#allocation2 + $0x50] sm:$0xff]
    %v322 = vld [vmem:[#allocation2 + $0x58] sm:$0xff]
    %v323 = vld [vmem:[#allocation2 + $0x60] sm:$0xff]
    %v324 = vld [vmem:[#allocation2 + $0x68] sm:$0xff]
    %v325 = vld [vmem:[#allocation2 + $0x70] sm:$0xff]
    %v326 = vld [vmem:[#allocation2 + $0x78] sm:$0xff]
    %v327 = vld [vmem:[%s2] sm:$0x1]
    %v329 = vlaneseq
    %v330 = vshrl.u32 %v329, 7
    %v331 = vsub.s32 0, %v330
    %v332 = vrot.slane %v327, %v331
    %v334 = vadd.f32 %v311, %v332
    %v335 = vadd.f32 %v312, %v332
    %v336 = vadd.f32 %v313, %v332
    %v337 = vadd.f32 %v314, %v332
    %v338 = vadd.f32 %v315, %v332
    %v339 = vadd.f32 %v316, %v332
    %v340 = vadd.f32 %v317, %v332
    %v341 = vadd.f32 %v318, %v332
    %v342 = vadd.f32 %v319, %v332
    %v343 = vadd.f32 %v320, %v332
    %v344 = vadd.f32 %v321, %v332
    %v345 = vadd.f32 %v322, %v332
    %v346 = vadd.f32 %v323, %v332
    %v347 = vadd.f32 %v324, %v332
    %v348 = vadd.f32 %v325, %v332
    %v349 = vadd.f32 %v326, %v332
    %350 = vst [vmem:[%s3] sm:$0xff] %v334
    %351 = vst [vmem:[%s3 + $0x8] sm:$0xff] %v335
    %352 = vst [vmem:[%s3 + $0x10] sm:$0xff] %v336
    %353 = vst [vmem:[%s3 + $0x18] sm:$0xff] %v337
    %354 = vst [vmem:[%s3 + $0x20] sm:$0xff] %v338
    %355 = vst [vmem:[%s3 + $0x28] sm:$0xff] %v339
    %356 = vst [vmem:[%s3 + $0x30] sm:$0xff] %v340
    %357 = vst [vmem:[%s3 + $0x38] sm:$0xff] %v341
    %358 = vst [vmem:[%s3 + $0x40] sm:$0xff] %v342
    %359 = vst [vmem:[%s3 + $0x48] sm:$0xff] %v343
    %360 = vst [vmem:[%s3 + $0x50] sm:$0xff] %v344
    %361 = vst [vmem:[%s3 + $0x58] sm:$0xff] %v345
    %362 = vst [vmem:[%s3 + $0x60] sm:$0xff] %v346
    %363 = vst [vmem:[%s3 + $0x68] sm:$0xff] %v347
    %364 = vst [vmem:[%s3 + $0x70] sm:$0xff] %v348
    %365 = vst [vmem:[%s3 + $0x78] sm:$0xff] %v349
  $region21: #{graph_convolution.3} parent=0 // pred_fallthru
    _
  // Predicated region
  $region22: #{graph_convolution.3} parent=0 // pred_check
    _
  $region23: #{graph_convolution.3} parent=0 // pred_check_branch
    %367 = sbr.rel (0) target = $region25
  $region24: #{graph_convolution.3} parent=0 // pred_region
    _
  $region25: #{graph_convolution.3} parent=0 // pred_fallthru
    _
  // Predicated region
  $region26: #{graph_convolution.3} parent=0 // pred_check
    _
  $region27: #{graph_convolution.3} parent=0 // pred_check_branch
    %369 = sbr.rel (0) target = $region29
  $region28: #{graph_convolution.3} parent=0 // pred_region
    _
  $region29: #{graph_convolution.3} parent=0 // pred_fallthru
    _

// kernel: graph_convolution.2
$region0: #{graph_convolution.2}
  #allocation0 [shape = 'u32[]', space=smem, size = 0x4, offset = 0x4, fixed_abs, tag = 'smem constant byte address 0x4 - core index']
  #allocation1 [shape = 'u32[144,128]{1,0:T(1,128)}', space=vmem, size = 0x12000, scoped, tag = 'internal scratch']
  #allocation2 [shape = 'f32[128,128]{1,0:T(8,128)}', space=vmem, size = 0x10000, scoped, tag = 'scratch operand']
  %s0 = inlined_call_operand.vmem [shape: bf16[128,128], index: 0, kind: input, shape index: {}]
  %s1 = inlined_call_operand.vmem [shape: bf16[128,128], index: 1, kind: input, shape index: {}]
  %s2 = inlined_call_operand.vmem [shape: f32[128,128], index: 2, kind: output, shape index: {}]
  %s3 = sld [smem:[#allocation0]]
  $region26: #{graph_convolution.2} parent=0
    _
  %s5 = ssub.s32 1, %s3
  %s6 = scalar_select 0, %s5, %s3
  // Predicated region
  $region2: #{graph_convolution.2} parent=0 // pred_check
    _
  $region3: #{graph_convolution.2} parent=0 // pred_check_branch
    %8 = sbr.rel (0) target = $region5
  $region4: #{graph_convolution.2} parent=0 // pred_region
    _
  $region5: #{graph_convolution.2} parent=0 // pred_fallthru
    _
  // Predicated region
  $region6: #{graph_convolution.2} parent=0 // pred_check
    _
  $region7: #{graph_convolution.2} parent=0 // pred_check_branch
    %10 = sbr.rel (0) target = $region9
  $region8: #{graph_convolution.2} parent=0 // pred_region
    _
  $region9: #{graph_convolution.2} parent=0 // pred_fallthru
    _
  %p12 = scmp.eq.s32.totalorder 0, 0
  // Predicated region
  $region10: #{graph_convolution.2} parent=0 // pred_check
    %p13 = pneg %p12
  $region11: #{graph_convolution.2} parent=0 // pred_check_branch
    %15 = sbr.rel (%p13) target = $region13
  $region12: #{graph_convolution.2} parent=0 // pred_region
    %16 = vst [vmem:[#allocation2] sm:$0xff] 0.0
    %17 = vst [vmem:[#allocation2 + $0x8] sm:$0xff] 0.0
    %18 = vst [vmem:[#allocation2 + $0x10] sm:$0xff] 0.0
    %19 = vst [vmem:[#allocation2 + $0x18] sm:$0xff] 0.0
    %20 = vst [vmem:[#allocation2 + $0x20] sm:$0xff] 0.0
    %21 = vst [vmem:[#allocation2 + $0x28] sm:$0xff] 0.0
    %22 = vst [vmem:[#allocation2 + $0x30] sm:$0xff] 0.0
    %23 = vst [vmem:[#allocation2 + $0x38] sm:$0xff] 0.0
    %24 = vst [vmem:[#allocation2 + $0x40] sm:$0xff] 0.0
    %25 = vst [vmem:[#allocation2 + $0x48] sm:$0xff] 0.0
    %26 = vst [vmem:[#allocation2 + $0x50] sm:$0xff] 0.0
    %27 = vst [vmem:[#allocation2 + $0x58] sm:$0xff] 0.0
    %28 = vst [vmem:[#allocation2 + $0x60] sm:$0xff] 0.0
    %29 = vst [vmem:[#allocation2 + $0x68] sm:$0xff] 0.0
    %30 = vst [vmem:[#allocation2 + $0x70] sm:$0xff] 0.0
    %31 = vst [vmem:[#allocation2 + $0x78] sm:$0xff] 0.0
  $region13: #{graph_convolution.2} parent=0 // pred_fallthru
    _
  %v32 = vld [vmem:[#allocation2] sm:$0xff]
  %v33 = vld [vmem:[#allocation2 + $0x8] sm:$0xff]
  %v34 = vld [vmem:[#allocation2 + $0x10] sm:$0xff]
  %v35 = vld [vmem:[#allocation2 + $0x18] sm:$0xff]
  %v36 = vld [vmem:[#allocation2 + $0x20] sm:$0xff]
  %v37 = vld [vmem:[#allocation2 + $0x28] sm:$0xff]
  %v38 = vld [vmem:[#allocation2 + $0x30] sm:$0xff]
  %v39 = vld [vmem:[#allocation2 + $0x38] sm:$0xff]
  %v40 = vld [vmem:[#allocation2 + $0x40] sm:$0xff]
  %v41 = vld [vmem:[#allocation2 + $0x48] sm:$0xff]
  %v42 = vld [vmem:[#allocation2 + $0x50] sm:$0xff]
  %v43 = vld [vmem:[#allocation2 + $0x58] sm:$0xff]
  %v44 = vld [vmem:[#allocation2 + $0x60] sm:$0xff]
  %v45 = vld [vmem:[#allocation2 + $0x68] sm:$0xff]
  %v46 = vld [vmem:[#allocation2 + $0x70] sm:$0xff]
  %v47 = vld [vmem:[#allocation2 + $0x78] sm:$0xff]
  %v48 = vld [vmem:[%s0] sm:$0xf]
  %v49 = vld [vmem:[%s0 + $0x4] sm:$0xf]
  %v50 = vld [vmem:[%s0 + $0x8] sm:$0xf]
  %v51 = vld [vmem:[%s0 + $0xc] sm:$0xf]
  %v52 = vld [vmem:[%s0 + $0x10] sm:$0xf]
  %v53 = vld [vmem:[%s0 + $0x14] sm:$0xf]
  %v54 = vld [vmem:[%s0 + $0x18] sm:$0xf]
  %v55 = vld [vmem:[%s0 + $0x1c] sm:$0xf]
  %v56 = vld [vmem:[%s0 + $0x20] sm:$0xf]
  %v57 = vld [vmem:[%s0 + $0x24] sm:$0xf]
  %v58 = vld [vmem:[%s0 + $0x28] sm:$0xf]
  %v59 = vld [vmem:[%s0 + $0x2c] sm:$0xf]
  %v60 = vld [vmem:[%s0 + $0x30] sm:$0xf]
  %v61 = vld [vmem:[%s0 + $0x34] sm:$0xf]
  %v62 = vld [vmem:[%s0 + $0x38] sm:$0xf]
  %v63 = vld [vmem:[%s0 + $0x3c] sm:$0xf]
  %v64 = vld [vmem:[%s1] sm:$0xf]
  %v65 = vld [vmem:[%s1 + $0x4] sm:$0xf]
  %v66 = vld [vmem:[%s1 + $0x8] sm:$0xf]
  %v67 = vld [vmem:[%s1 + $0xc] sm:$0xf]
  %v68 = vld [vmem:[%s1 + $0x10] sm:$0xf]
  %v69 = vld [vmem:[%s1 + $0x14] sm:$0xf]
  %v70 = vld [vmem:[%s1 + $0x18] sm:$0xf]
  %v71 = vld [vmem:[%s1 + $0x1c] sm:$0xf]
  %v72 = vld [vmem:[%s1 + $0x20] sm:$0xf]
  %v73 = vld [vmem:[%s1 + $0x24] sm:$0xf]
  %v74 = vld [vmem:[%s1 + $0x28] sm:$0xf]
  %v75 = vld [vmem:[%s1 + $0x2c] sm:$0xf]
  %v76 = vld [vmem:[%s1 + $0x30] sm:$0xf]
  %v77 = vld [vmem:[%s1 + $0x34] sm:$0xf]
  %v78 = vld [vmem:[%s1 + $0x38] sm:$0xf]
  %v79 = vld [vmem:[%s1 + $0x3c] sm:$0xf]
  %v96 = vunpack.c.l.b16 %v48
  %v97 = vunpack.c.l.b16 %v49
  %v98 = vunpack.c.l.b16 %v50
  %v99 = vunpack.c.l.b16 %v51
  %v100 = vunpack.c.l.b16 %v52
  %v101 = vunpack.c.l.b16 %v53
  %v102 = vunpack.c.l.b16 %v54
  %v103 = vunpack.c.l.b16 %v55
  %v104 = vunpack.c.l.b16 %v56
  %v105 = vunpack.c.l.b16 %v57
  %v106 = vunpack.c.l.b16 %v58
  %v107 = vunpack.c.l.b16 %v59
  %v108 = vunpack.c.l.b16 %v60
  %v109 = vunpack.c.l.b16 %v61
  %v110 = vunpack.c.l.b16 %v62
  %v111 = vunpack.c.l.b16 %v63
  %v112 = vpack.c.b16 %v97, %v96
  %v113 = vpack.c.b16 %v99, %v98
  %v114 = vpack.c.b16 %v101, %v100
  %v115 = vpack.c.b16 %v103, %v102
  %v116 = vpack.c.b16 %v105, %v104
  %v117 = vpack.c.b16 %v107, %v106
  %v118 = vpack.c.b16 %v109, %v108
  %v119 = vpack.c.b16 %v111, %v110
  %v144 = vunpack.c.l.b16 %v64
  %v145 = vunpack.c.l.b16 %v65
  %v146 = vunpack.c.l.b16 %v66
  %v147 = vunpack.c.l.b16 %v67
  %v148 = vunpack.c.l.b16 %v68
  %v149 = vunpack.c.l.b16 %v69
  %v150 = vunpack.c.l.b16 %v70
  %v151 = vunpack.c.l.b16 %v71
  %v152 = vunpack.c.l.b16 %v72
  %v153 = vunpack.c.l.b16 %v73
  %v154 = vunpack.c.l.b16 %v74
  %v155 = vunpack.c.l.b16 %v75
  %v156 = vunpack.c.l.b16 %v76
  %v157 = vunpack.c.l.b16 %v77
  %v158 = vunpack.c.l.b16 %v78
  %v159 = vunpack.c.l.b16 %v79
  %v160 = vpack.c.b16 %v145, %v144
  %v161 = vpack.c.b16 %v147, %v146
  %v162 = vpack.c.b16 %v149, %v148
  %v163 = vpack.c.b16 %v151, %v150
  %v164 = vpack.c.b16 %v153, %v152
  %v165 = vpack.c.b16 %v155, %v154
  %v166 = vpack.c.b16 %v157, %v156
  %v167 = vpack.c.b16 %v159, %v158
  %176 = vmatprep.subr.bf16.mxu0 0
  %177 = vmatpush1.bf16.msra.mxu0 %v167
  %178 = vmatprep.subr.bf16.mxu0 0
  %179 = vmatpush1.bf16.msra.mxu0 %v166
  %180 = vmatprep.subr.bf16.mxu0 0
  %181 = vmatpush1.bf16.msra.mxu0 %v165
  %182 = vmatprep.subr.bf16.mxu0 0
  %183 = vmatpush1.bf16.msra.mxu0 %v164
  %184 = vmatprep.subr.bf16.mxu0 0
  %185 = vmatpush1.bf16.msra.mxu0 %v163
  %186 = vmatprep.subr.bf16.mxu0 0
  %187 = vmatpush1.bf16.msra.mxu0 %v162
  %188 = vmatprep.subr.bf16.mxu0 0
  %189 = vmatpush1.bf16.msra.mxu0 %v161
  %190 = vmatprep.subr.bf16.mxu0 0
  %191 = vmatpush1.bf16.msra.mxu0 %v160
  %192 = vmatprep.subr.bf16.mxu0 0
  %193 = vmatpush2.bf16.msra.mxu0 0
  %194 = vmatprep.subr.bf16.mxu0 0
  %195 = vmatpush2.bf16.msra.mxu0 0
  %196 = vmatprep.subr.bf16.mxu0 0
  %197 = vmatpush2.bf16.msra.mxu0 0
  %198 = vmatprep.subr.bf16.mxu0 0
  %199 = vmatpush2.bf16.msra.mxu0 0
  %200 = vmatprep.subr.bf16.mxu0 0
  %201 = vmatpush2.bf16.msra.mxu0 0
  %202 = vmatprep.subr.bf16.mxu0 0
  %203 = vmatpush2.bf16.msra.mxu0 0
  %204 = vmatprep.subr.bf16.mxu0 0
  %205 = vmatpush2.bf16.msra.mxu0 0
  %206 = vmatprep.subr.bf16.mxu0 0
  %207 = vmatpush2.bf16.msra.mxu0 0
  %208 = vmatprep.mubr.bf16.mxu0 0
  %209 = vmatmul.mubr.bf16.gmra.mxu0 %v112
  %v210 = vpop.f32.mrf.mxu0
  %v211 = vadd.f32 0.0, %v210
  %v212 = vpop.f32.mrf.mxu0
  %v213 = vpop.f32.mrf.mxu0
  %v214 = vadd.f32 0.0, %v213
  %v215 = vpop.f32.mrf.mxu0
  %216 = vmatprep.mubr.bf16.mxu0 0
  %217 = vmatmul.mubr.bf16.gmra.mxu0 %v113
  %v218 = vpop.f32.mrf.mxu0
  %v219 = vadd.f32 0.0, %v218
  %v220 = vpop.f32.mrf.mxu0
  %v221 = vpop.f32.mrf.mxu0
  %v222 = vadd.f32 0.0, %v221
  %v223 = vpop.f32.mrf.mxu0
  %224 = vmatprep.mubr.bf16.mxu0 0
  %225 = vmatmul.mubr.bf16.gmra.mxu0 %v114
  %v226 = vpop.f32.mrf.mxu0
  %v227 = vadd.f32 0.0, %v226
  %v228 = vpop.f32.mrf.mxu0
  %v229 = vpop.f32.mrf.mxu0
  %v230 = vadd.f32 0.0, %v229
  %v231 = vpop.f32.mrf.mxu0
  %232 = vmatprep.mubr.bf16.mxu0 0
  %233 = vmatmul.mubr.bf16.gmra.mxu0 %v115
  %v234 = vpop.f32.mrf.mxu0
  %v235 = vadd.f32 0.0, %v234
  %v236 = vpop.f32.mrf.mxu0
  %v237 = vpop.f32.mrf.mxu0
  %v238 = vadd.f32 0.0, %v237
  %v239 = vpop.f32.mrf.mxu0
  %240 = vmatprep.mubr.bf16.mxu0 0
  %241 = vmatmul.mubr.bf16.gmra.mxu0 %v116
  %v242 = vpop.f32.mrf.mxu0
  %v243 = vadd.f32 0.0, %v242
  %v244 = vpop.f32.mrf.mxu0
  %v245 = vpop.f32.mrf.mxu0
  %v246 = vadd.f32 0.0, %v245
  %v247 = vpop.f32.mrf.mxu0
  %248 = vmatprep.mubr.bf16.mxu0 0
  %249 = vmatmul.mubr.bf16.gmra.mxu0 %v117
  %v250 = vpop.f32.mrf.mxu0
  %v251 = vadd.f32 0.0, %v250
  %v252 = vpop.f32.mrf.mxu0
  %v253 = vpop.f32.mrf.mxu0
  %v254 = vadd.f32 0.0, %v253
  %v255 = vpop.f32.mrf.mxu0
  %256 = vmatprep.mubr.bf16.mxu0 0
  %257 = vmatmul.mubr.bf16.gmra.mxu0 %v118
  %v258 = vpop.f32.mrf.mxu0
  %v259 = vadd.f32 0.0, %v258
  %v260 = vpop.f32.mrf.mxu0
  %v261 = vpop.f32.mrf.mxu0
  %v262 = vadd.f32 0.0, %v261
  %v263 = vpop.f32.mrf.mxu0
  %264 = vmatprep.mubr.bf16.mxu0 0
  %265 = vmatmul.mubr.bf16.gmra.mxu0 %v119
  %v266 = vpop.f32.mrf.mxu0
  %v267 = vadd.f32 0.0, %v266
  %v268 = vpop.f32.mrf.mxu0
  %v269 = vpop.f32.mrf.mxu0
  %v270 = vadd.f32 0.0, %v269
  %v271 = vpop.f32.mrf.mxu0
  %272 = vdwg.mxu0
  %v273 = vadd.f32 %v32, %v211
  %v274 = vadd.f32 %v33, %v214
  %v275 = vadd.f32 %v34, %v219
  %v276 = vadd.f32 %v35, %v222
  %v277 = vadd.f32 %v36, %v227
  %v278 = vadd.f32 %v37, %v230
  %v279 = vadd.f32 %v38, %v235
  %v280 = vadd.f32 %v39, %v238
  %v281 = vadd.f32 %v40, %v243
  %v282 = vadd.f32 %v41, %v246
  %v283 = vadd.f32 %v42, %v251
  %v284 = vadd.f32 %v43, %v254
  %v285 = vadd.f32 %v44, %v259
  %v286 = vadd.f32 %v45, %v262
  %v287 = vadd.f32 %v46, %v267
  %v288 = vadd.f32 %v47, %v270
  %289 = vst [vmem:[#allocation2] sm:$0xff] %v273
  %290 = vst [vmem:[#allocation2 + $0x8] sm:$0xff] %v274
  %291 = vst [vmem:[#allocation2 + $0x10] sm:$0xff] %v275
  %292 = vst [vmem:[#allocation2 + $0x18] sm:$0xff] %v276
  %293 = vst [vmem:[#allocation2 + $0x20] sm:$0xff] %v277
  %294 = vst [vmem:[#allocation2 + $0x28] sm:$0xff] %v278
  %295 = vst [vmem:[#allocation2 + $0x30] sm:$0xff] %v279
  %296 = vst [vmem:[#allocation2 + $0x38] sm:$0xff] %v280
  %297 = vst [vmem:[#allocation2 + $0x40] sm:$0xff] %v281
  %298 = vst [vmem:[#allocation2 + $0x48] sm:$0xff] %v282
  %299 = vst [vmem:[#allocation2 + $0x50] sm:$0xff] %v283
  %300 = vst [vmem:[#allocation2 + $0x58] sm:$0xff] %v284
  %301 = vst [vmem:[#allocation2 + $0x60] sm:$0xff] %v285
  %302 = vst [vmem:[#allocation2 + $0x68] sm:$0xff] %v286
  %303 = vst [vmem:[#allocation2 + $0x70] sm:$0xff] %v287
  %304 = vst [vmem:[#allocation2 + $0x78] sm:$0xff] %v288
  // Predicated region
  $region14: #{graph_convolution.2} parent=0 // pred_check
    %p305 = pneg %p12
  $region15: #{graph_convolution.2} parent=0 // pred_check_branch
    %307 = sbr.rel (%p305) target = $region17
  $region16: #{graph_convolution.2} parent=0 // pred_region
    %v308 = vld [vmem:[#allocation2] sm:$0xff]
    %v309 = vld [vmem:[#allocation2 + $0x8] sm:$0xff]
    %v310 = vld [vmem:[#allocation2 + $0x10] sm:$0xff]
    %v311 = vld [vmem:[#allocation2 + $0x18] sm:$0xff]
    %v312 = vld [vmem:[#allocation2 + $0x20] sm:$0xff]
    %v313 = vld [vmem:[#allocation2 + $0x28] sm:$0xff]
    %v314 = vld [vmem:[#allocation2 + $0x30] sm:$0xff]
    %v315 = vld [vmem:[#allocation2 + $0x38] sm:$0xff]
    %v316 = vld [vmem:[#allocation2 + $0x40] sm:$0xff]
    %v317 = vld [vmem:[#allocation2 + $0x48] sm:$0xff]
    %v318 = vld [vmem:[#allocation2 + $0x50] sm:$0xff]
    %v319 = vld [vmem:[#allocation2 + $0x58] sm:$0xff]
    %v320 = vld [vmem:[#allocation2 + $0x60] sm:$0xff]
    %v321 = vld [vmem:[#allocation2 + $0x68] sm:$0xff]
    %v322 = vld [vmem:[#allocation2 + $0x70] sm:$0xff]
    %v323 = vld [vmem:[#allocation2 + $0x78] sm:$0xff]
    %324 = vst [vmem:[%s2] sm:$0xff] %v308
    %325 = vst [vmem:[%s2 + $0x8] sm:$0xff] %v309
    %326 = vst [vmem:[%s2 + $0x10] sm:$0xff] %v310
    %327 = vst [vmem:[%s2 + $0x18] sm:$0xff] %v311
    %328 = vst [vmem:[%s2 + $0x20] sm:$0xff] %v312
    %329 = vst [vmem:[%s2 + $0x28] sm:$0xff] %v313
    %330 = vst [vmem:[%s2 + $0x30] sm:$0xff] %v314
    %331 = vst [vmem:[%s2 + $0x38] sm:$0xff] %v315
    %332 = vst [vmem:[%s2 + $0x40] sm:$0xff] %v316
    %333 = vst [vmem:[%s2 + $0x48] sm:$0xff] %v317
    %334 = vst [vmem:[%s2 + $0x50] sm:$0xff] %v318
    %335 = vst [vmem:[%s2 + $0x58] sm:$0xff] %v319
    %336 = vst [vmem:[%s2 + $0x60] sm:$0xff] %v320
    %337 = vst [vmem:[%s2 + $0x68] sm:$0xff] %v321
    %338 = vst [vmem:[%s2 + $0x70] sm:$0xff] %v322
    %339 = vst [vmem:[%s2 + $0x78] sm:$0xff] %v323
  $region17: #{graph_convolution.2} parent=0 // pred_fallthru
    _
  // Predicated region
  $region18: #{graph_convolution.2} parent=0 // pred_check
    _
  $region19: #{graph_convolution.2} parent=0 // pred_check_branch
    %341 = sbr.rel (0) target = $region21
  $region20: #{graph_convolution.2} parent=0 // pred_region
    _
  $region21: #{graph_convolution.2} parent=0 // pred_fallthru
    _
  // Predicated region
  $region22: #{graph_convolution.2} parent=0 // pred_check
    _
  $region23: #{graph_convolution.2} parent=0 // pred_check_branch
    %343 = sbr.rel (0) target = $region25
  $region24: #{graph_convolution.2} parent=0 // pred_region
    _
  $region25: #{graph_convolution.2} parent=0 // pred_fallthru
    _

</llo_original>
